<compile_context>
chip_gen: v6e
topology: v6e:2x2x1
jax: 0.10.0
libtpu: 0.0.40
codegen_flags: <defaults>
</compile_context>

<pallas_src>
import functools

import numpy as np
import jax
import jax.numpy as jnp
from jax.experimental import pallas as pl
from jax.experimental.pallas import tpu as pltpu


# ---------------------------------------------------------------------------
# Synthetic sorted vocabulary (stands in for sort_vocab()).
# ---------------------------------------------------------------------------
VOCAB = sorted(f"word{i:02d}" for i in range(32))   # len(VOCAB) == 32
VOCAB_INDEX = {w: i for i, w in enumerate(VOCAB)}
VOCAB_SIZE = len(VOCAB)                             # LM_intermediate_lang_dim
LM_OUT_DIM = 64                                     # config.LM_out_dim

LANE = 128
PACK = LANE // VOCAB_SIZE                           # 4 batch rows per packed row
K_PACKED = PACK * VOCAB_SIZE                        # 128: lane-dense contraction
O_PACKED = PACK * LM_OUT_DIM                        # 256: lane-dense output
MAX_TILE_B = 2048                                   # unpacked rows per grid step
MAX_TILE_PACKED = MAX_TILE_B // PACK                # 512 packed rows per step


def _round_up(x, m):
    return ((x + m - 1) // m) * m


def _choose_tile(bp):
    """Packed-row tile.  Cap at ~half the batch so the grid has >= 2 steps
    (lets v7x's 2 TensorCores both work via dimension_semantics=parallel)."""
    if bp <= 8:
        return 8
    half = _round_up((bp + 1) // 2, 8)
    return max(8, min(MAX_TILE_PACKED, half, bp))


# ---------------------------------------------------------------------------
# Pallas kernel: fused Linear + ReLU (proj_out hot path), one batch tile.
# ---------------------------------------------------------------------------
def bow_proj_kernel(x_ref, wt_ref, b_ref, o_ref):
    # x_ref : (tile_p, 128)  bf16 VMEM tile (4 packed bag-of-words rows / row)
    # wt_ref: (128, 256)     bf16 VMEM tile (block-diagonal replicated weight)
    # b_ref : (1, 256)       f32  VMEM tile (bias tiled 4x)
    # o_ref : (tile_p, 256)  f32  VMEM tile -- lane-dense, unmasked stores
    y = jnp.dot(x_ref[...], wt_ref[...], preferred_element_type=jnp.float32)
    o_ref[...] = jnp.maximum(y + b_ref[...], 0.0)    # bias + ReLU epilogue (f32)


def bow_proj_out(x, w_bd, bias_packed, *, tile_p):
    """x: (bp, 128) bf16 packed freq rows -> (bp, 256) f32."""
    bp, kp = x.shape
    op = w_bd.shape[1]
    grid = pl.cdiv(bp, tile_p)                       # ragged last block is fine:
    #  each output row depends only on its own input row; OOB rows are dropped.
    cost = pl.CostEstimate(
        flops=2 * bp * kp * op,
        transcendentals=0,
        bytes_accessed=2 * bp * kp + 2 * kp * op + 4 * op + 4 * bp * op,
    )
    return pl.pallas_call(
        bow_proj_kernel,
        out_shape=jax.ShapeDtypeStruct((bp, op), jnp.float32),
        grid_spec=pltpu.PrefetchScalarGridSpec(
            num_scalar_prefetch=0,
            grid=(grid,),
            in_specs=[
                pl.BlockSpec((tile_p, kp), lambda i: (i, 0)),
                pl.BlockSpec((kp, op), lambda i: (0, 0)),   # weight: VMEM-resident
                pl.BlockSpec((1, op), lambda i: (0, 0)),    # bias:   VMEM-resident
            ],
            out_specs=pl.BlockSpec((tile_p, op), lambda i: (i, 0)),
        ),
        compiler_params=pltpu.CompilerParams(
            dimension_semantics=("parallel",)),  # v7x: shard batch over 2 TCs
        cost_estimate=cost,
    )(x, w_bd, bias_packed)


@jax.jit
def bow_proj_device(freq_counts, w_bd, bias_packed):
    """freq_counts: (B, 32) int16 counts -> (B, 64) f32 (pad, pack, kernel, unpack)."""
    B = freq_counts.shape[0]
    if B == 0:                                       # guard: empty batch
        return jnp.zeros((0, LM_OUT_DIM), jnp.float32)
    b_pad = _round_up(B, PACK * 8)                   # multiple of 32 (pack + sublane)
    freq = freq_counts.astype(jnp.bfloat16)          # counts are exact in bf16
    if b_pad != B:
        freq = jnp.pad(freq, ((0, b_pad - B), (0, 0)))
    bp = b_pad // PACK
    x = freq.reshape(bp, K_PACKED)                   # free row-major 4-row packing
    out = bow_proj_out(x, w_bd, bias_packed, tile_p=_choose_tile(bp))
    return out.reshape(b_pad, LM_OUT_DIM)[:B]        # free row-major unpack + tiny slice


# ---------------------------------------------------------------------------
# Host-side glue: bag-of-words count matrix (string processing).
# ---------------------------------------------------------------------------
def make_freq_matrix(instructions):
    """Single host-side numpy pass -> (B, V) int16 bag-of-words counts."""
    freq = np.zeros((len(instructions), VOCAB_SIZE), dtype=np.int16)
    for b, instruct in enumerate(instructions):
        for word in instruct.split():
            # KeyError on out-of-vocabulary words (same failure mode as the
            # original VOCAB.index(word) ValueError) -- host-side crash path.
            freq[b, VOCAB_INDEX[word]] += 1
    return freq


def bow_forward(instructions, w_bd, bias_packed):
    # TODO(synk): string tokenization / vocab lookup has no Pallas equivalent;
    # it stays on the host -- one int16 numpy matrix, one device transfer.
    freq = jnp.asarray(make_freq_matrix(instructions))
    return bow_proj_device(freq, w_bd, bias_packed)


# ---------------------------------------------------------------------------
# Deterministic parameter init (mimics nn.Linear uniform(-1/sqrt(V), 1/sqrt(V)))
# ---------------------------------------------------------------------------
def init_params(key):
    kw, kb = jax.random.split(key)
    bound = 1.0 / (VOCAB_SIZE ** 0.5)
    # PyTorch stores weight as (out, in); keep it pre-transposed (in, out).
    weight_t = jax.random.uniform(
        kw, (VOCAB_SIZE, LM_OUT_DIM), jnp.float32, minval=-bound, maxval=bound)
    bias = jax.random.uniform(
        kb, (1, LM_OUT_DIM), jnp.float32, minval=-bound, maxval=bound)
    return weight_t, bias


def make_packed_params(weight_t, bias):
    """Block-diagonal weight (128, 256) bf16 + 4x-tiled bias (1, 256) f32.
    Column block j applies the original weight to packed-row segment j, so
    (B/4,128) @ W_bd == per-row Linear(32,64) laid out lane-dense."""
    w_bd = jnp.zeros((K_PACKED, O_PACKED), jnp.float32)
    for i in range(PACK):
        w_bd = w_bd.at[i * VOCAB_SIZE:(i + 1) * VOCAB_SIZE,
                       i * LM_OUT_DIM:(i + 1) * LM_OUT_DIM].set(weight_t)
    bias_packed = jnp.tile(bias, (1, PACK)).astype(jnp.float32)
    return w_bd.astype(jnp.bfloat16), bias_packed


if __name__ == "__main__":
    key = jax.random.PRNGKey(0)
    kparam, kwords = jax.random.split(key)

    weight_t, bias = init_params(kparam)
    w_bd, bias_packed = make_packed_params(weight_t, bias)

    words_per_instruction = 6
    # batch=8 -> single grid step; batch=72 -> grid=2 with a ragged last block.
    for batch in (8, 72):
        kb = jax.random.fold_in(kwords, batch)
        idx = np.asarray(jax.random.randint(
            kb, (batch, words_per_instruction), 0, VOCAB_SIZE))
        instructions = [" ".join(VOCAB[int(j)] for j in row) for row in idx]

        out = jax.block_until_ready(bow_forward(instructions, w_bd, bias_packed))

        # Pure-JAX f32 reference of the same forward pass (un-packed params).
        freq_ref = jnp.asarray(make_freq_matrix(instructions).astype(np.float32))
        ref = jnp.maximum(freq_ref @ weight_t + bias, 0.0)
        assert out.shape == (batch, LM_OUT_DIM)
        # bf16 weight in the kernel -> slightly looser tolerance than pure f32.
        assert jnp.allclose(out, ref, atol=1e-2), "mismatch vs reference"

    print("KERNEL_OK")
</pallas_src>

<mosaic_0001>
module attributes {stable_mosaic.version = 11 : i64} {
  func.func @bow_proj_kernel(%arg0: i32, %arg1: memref<8x128xbf16, #tpu.memory_space<vmem>>, %arg2: memref<128x256xbf16, #tpu.memory_space<vmem>>, %arg3: memref<1x256xf32, #tpu.memory_space<vmem>>, %arg4: memref<8x256xf32, #tpu.memory_space<vmem>>) attributes {dimension_semantics = [#tpu.dimension_semantics<parallel>], iteration_bounds = array<i64: 1>, scalar_prefetch = 0 : i64, scratch_operands = 0 : i64, tpu.core_type = #tpu.core_type<tc>, window_params = [{transform_indices = @transform_0, window_bounds = array<i64: 8, 128>}, {pipeline_mode = #tpu.pipeline_mode<synchronous>, transform_indices = @transform_1, window_bounds = array<i64: 128, 256>}, {pipeline_mode = #tpu.pipeline_mode<synchronous>, transform_indices = @transform_2, window_bounds = array<i64: 1, 256>}, {transform_indices = @transform_3, window_bounds = array<i64: 8, 256>}]} {
    %c0 = arith.constant 0 : index
    %c0_0 = arith.constant 0 : index
    %0 = vector.load %arg1[%c0, %c0_0] : memref<8x128xbf16, #tpu.memory_space<vmem>>, vector<8x128xbf16>
    %c0_1 = arith.constant 0 : index
    %c0_2 = arith.constant 0 : index
    %1 = vector.load %arg2[%c0_1, %c0_2] : memref<128x256xbf16, #tpu.memory_space<vmem>>, vector<128x256xbf16>
    %cst = arith.constant dense<0.000000e+00> : vector<8x256xf32>
    %2 = tpu.matmul %0, %1, %cst {dimension_numbers = #tpu.dot_dimension_numbers<[1], [0], [0], [1], [0, 0, 1, 1], [], []>} : vector<8x128xbf16>, vector<128x256xbf16>, vector<8x256xf32> -> vector<8x256xf32>
    %c0_3 = arith.constant 0 : index
    %c0_4 = arith.constant 0 : index
    %3 = vector.load %arg3[%c0_3, %c0_4] : memref<1x256xf32, #tpu.memory_space<vmem>>, vector<1x256xf32>
    %4 = vector.broadcast %3 : vector<1x256xf32> to vector<8x256xf32>
    %5 = arith.addf %2, %4 : vector<8x256xf32>
    %cst_5 = arith.constant 0.000000e+00 : f32
    %6 = vector.broadcast %cst_5 : f32 to vector<8x256xf32>
    %7 = arith.maximumf %5, %6 : vector<8x256xf32>
    %c0_6 = arith.constant 0 : index
    %c0_7 = arith.constant 0 : index
    %8 = vector.load %arg4[%c0_6, %c0_7] : memref<8x256xf32, #tpu.memory_space<vmem>>, vector<8x256xf32>
    tpu.vector_store %arg4[%c0_6, %c0_7], %7 {strides = array<i32>} : memref<8x256xf32, #tpu.memory_space<vmem>>, vector<8x256xf32>,
    return
  }
  func.func @transform_0(%arg0: i32) -> (i32, i32) {
    %c0_i32 = arith.constant 0 : i32
    %c0_i32_0 = arith.constant 0 : i32
    return %arg0, %c0_i32 : i32, i32
  }
  func.func @transform_1(%arg0: i32) -> (i32, i32) {
    %c0_i32 = arith.constant 0 : i32
    %c0_i32_0 = arith.constant 0 : i32
    %c0_i32_1 = arith.constant 0 : i32
    return %c0_i32, %c0_i32_0 : i32, i32
  }
  func.func @transform_2(%arg0: i32) -> (i32, i32) {
    %c0_i32 = arith.constant 0 : i32
    %c0_i32_0 = arith.constant 0 : i32
    %c0_i32_1 = arith.constant 0 : i32
    return %c0_i32, %c0_i32_0 : i32, i32
  }
  func.func @transform_3(%arg0: i32) -> (i32, i32) {
    %c0_i32 = arith.constant 0 : i32
    %c0_i32_0 = arith.constant 0 : i32
    return %arg0, %c0_i32 : i32, i32
  }
}

</mosaic_0001>

<llo_original>
// kernel: bow_proj_device.1
$region0: #{bow_proj_device.1}
  #allocation0 [shape = 'u32[]', space=smem, size = 0x4, offset = 0x4, fixed_abs, tag = 'smem constant byte address 0x4 - core index']
  #allocation1 [shape = 'u32[144,128]{1,0:T(1,128)}', space=vmem, size = 0x12000, scoped, tag = 'internal scratch']
  %s0 = inlined_call_operand.vmem [shape: bf16[8,128], index: 0, kind: input, shape index: {}]
  %s1 = inlined_call_operand.hbm [shape: bf16[128,256], index: 1, kind: input, shape index: {}]
  %s2 = inlined_call_operand.vmem [shape: f32[1,256], index: 2, kind: input, shape index: {}]
  %s3 = inlined_call_operand.vmem [shape: f32[8,256], index: 3, kind: output, shape index: {}]
  %s4 = sld [smem:[#allocation0]]
  $region26: #{bow_proj_device.1} parent=0
    _
  %s6 = ssub.s32 1, %s4
  %s7 = scalar_select 0, %s6, %s4
  $region1: #{bow_proj_device.1} parent=0
    #allocation2 [shape = 'u8[65536]{0}', space=vmem, size = 0x10000, scoped, tag = 'input window, operand 1, single buffered']
    #allocation3 [shape = 's32[1]{0}', space=sflag, size = 0x4, scoped, tag = 'scoped memory for bow_proj_device.1']
    %8 = vsyncpa [#allocation3], 0
    // Predicated region
    $region2: #{bow_proj_device.1} parent=1 // pred_check
      _
    $region3: #{bow_proj_device.1} parent=1 // pred_check_branch
      %10 = sbr.rel (0) target = $region5
    $region4: #{bow_proj_device.1} parent=1 // pred_region
      _
    $region5: #{bow_proj_device.1} parent=1 // pred_fallthru
      _
    // Predicated region
    $region6: #{bow_proj_device.1} parent=1 // pred_check
      _
    $region7: #{bow_proj_device.1} parent=1 // pred_check_branch
      %12 = sbr.rel (0) target = $region9
    $region8: #{bow_proj_device.1} parent=1 // pred_region
      %s14 = ssub.s32 2048, 2048
      %15 = vsyncadd [#allocation3], %s14
      %s16 = sshll.u32 [#allocation2], 4
      %s17 = int_to_ptr.vmem [resolvable:$true] %s16
      %22 = dma.hbm_to_vmem [thread:$0]  %s1, 2048, %s17, [#allocation3], 128, 128, 8
    $region9: #{bow_proj_device.1} parent=1 // pred_fallthru
      _
    // Predicated region
    $region10: #{bow_proj_device.1} parent=1 // pred_check
      _
    $region11: #{bow_proj_device.1} parent=1 // pred_check_branch
      %24 = sbr.rel (0) target = $region13
    $region12: #{bow_proj_device.1} parent=1 // pred_region
      _
    $region13: #{bow_proj_device.1} parent=1 // pred_fallthru
      _
    // Predicated region
    $region14: #{bow_proj_device.1} parent=1 // pred_check
      _
    $region15: #{bow_proj_device.1} parent=1 // pred_check_branch
      %26 = sbr.rel (0) target = $region17
    $region16: #{bow_proj_device.1} parent=1 // pred_region
      %27 = dma.done [#allocation3], 2048
    $region17: #{bow_proj_device.1} parent=1 // pred_fallthru
      _
    %v29 = vld [vmem:[%s0] sm:$0xf]
    %v30 = vld [vmem:[#allocation2] sm:$0xff]
    %v31 = vld [vmem:[#allocation2 + $0x8] sm:$0xff]
    %v32 = vld [vmem:[#allocation2 + $0x10] sm:$0xff]
    %v33 = vld [vmem:[#allocation2 + $0x18] sm:$0xff]
    %v34 = vld [vmem:[#allocation2 + $0x20] sm:$0xff]
    %v35 = vld [vmem:[#allocation2 + $0x28] sm:$0xff]
    %v36 = vld [vmem:[#allocation2 + $0x30] sm:$0xff]
    %v37 = vld [vmem:[#allocation2 + $0x38] sm:$0xff]
    %v38 = vld [vmem:[#allocation2 + $0x40] sm:$0xff]
    %v39 = vld [vmem:[#allocation2 + $0x48] sm:$0xff]
    %v40 = vld [vmem:[#allocation2 + $0x50] sm:$0xff]
    %v41 = vld [vmem:[#allocation2 + $0x58] sm:$0xff]
    %v42 = vld [vmem:[#allocation2 + $0x60] sm:$0xff]
    %v43 = vld [vmem:[#allocation2 + $0x68] sm:$0xff]
    %v44 = vld [vmem:[#allocation2 + $0x70] sm:$0xff]
    %v45 = vld [vmem:[#allocation2 + $0x78] sm:$0xff]
    %v46 = vld [vmem:[%s2] sm:$0x3]
    %v48 = vlaneseq
    %v49 = vshrl.u32 %v48, 7
    %v50 = vsub.s32 0, %v49
    %v51 = vrot.slane %v46, %v50
    %v52 = vlaneseq
    %v53 = vshrl.u32 %v52, 7
    %v54 = vsub.s32 1, %v53
    %v55 = vrot.slane %v46, %v54
    %v74 = vunpack.c.l.b16 %v30
    %v75 = vunpack.c.h.b16 %v30
    %v76 = vunpack.c.l.b16 %v31
    %v77 = vunpack.c.h.b16 %v31
    %v78 = vunpack.c.l.b16 %v32
    %v79 = vunpack.c.h.b16 %v32
    %v80 = vunpack.c.l.b16 %v33
    %v81 = vunpack.c.h.b16 %v33
    %v82 = vunpack.c.l.b16 %v34
    %v83 = vunpack.c.h.b16 %v34
    %v84 = vunpack.c.l.b16 %v35
    %v85 = vunpack.c.h.b16 %v35
    %v86 = vunpack.c.l.b16 %v36
    %v87 = vunpack.c.h.b16 %v36
    %v88 = vunpack.c.l.b16 %v37
    %v89 = vunpack.c.h.b16 %v37
    %v90 = vunpack.c.l.b16 %v38
    %v91 = vunpack.c.h.b16 %v38
    %v92 = vunpack.c.l.b16 %v39
    %v93 = vunpack.c.h.b16 %v39
    %v94 = vunpack.c.l.b16 %v40
    %v95 = vunpack.c.h.b16 %v40
    %v96 = vunpack.c.l.b16 %v41
    %v97 = vunpack.c.h.b16 %v41
    %v98 = vunpack.c.l.b16 %v42
    %v99 = vunpack.c.h.b16 %v42
    %v100 = vunpack.c.l.b16 %v43
    %v101 = vunpack.c.h.b16 %v43
    %v102 = vunpack.c.l.b16 %v44
    %v103 = vunpack.c.h.b16 %v44
    %v104 = vunpack.c.l.b16 %v45
    %v105 = vunpack.c.h.b16 %v45
    %v106 = vpack.c.b16 %v76, %v74
    %v107 = vpack.c.b16 %v77, %v75
    %v108 = vpack.c.b16 %v80, %v78
    %v109 = vpack.c.b16 %v81, %v79
    %v110 = vpack.c.b16 %v84, %v82
    %v111 = vpack.c.b16 %v85, %v83
    %v112 = vpack.c.b16 %v88, %v86
    %v113 = vpack.c.b16 %v89, %v87
    %v114 = vpack.c.b16 %v92, %v90
    %v115 = vpack.c.b16 %v93, %v91
    %v116 = vpack.c.b16 %v96, %v94
    %v117 = vpack.c.b16 %v97, %v95
    %v118 = vpack.c.b16 %v100, %v98
    %v119 = vpack.c.b16 %v101, %v99
    %v120 = vpack.c.b16 %v104, %v102
    %v121 = vpack.c.b16 %v105, %v103
    %138 = vmatprep.subr.bf16.mxu0 %v121
    %139 = vmatpush1.bf16.msra.mxu0 %v120
    %140 = vmatprep.subr.bf16.mxu0 %v119
    %141 = vmatpush1.bf16.msra.mxu0 %v118
    %142 = vmatprep.subr.bf16.mxu0 %v117
    %143 = vmatpush1.bf16.msra.mxu0 %v116
    %144 = vmatprep.subr.bf16.mxu0 %v115
    %145 = vmatpush1.bf16.msra.mxu0 %v114
    %146 = vmatprep.subr.bf16.mxu0 %v113
    %147 = vmatpush1.bf16.msra.mxu0 %v112
    %148 = vmatprep.subr.bf16.mxu0 %v111
    %149 = vmatpush1.bf16.msra.mxu0 %v110
    %150 = vmatprep.subr.bf16.mxu0 %v109
    %151 = vmatpush1.bf16.msra.mxu0 %v108
    %152 = vmatprep.subr.bf16.mxu0 %v107
    %153 = vmatpush1.bf16.msra.mxu0 %v106
    %154 = vmatprep.subr.bf16.mxu0 0
    %155 = vmatpush2.bf16.msra.mxu0 0
    %156 = vmatprep.subr.bf16.mxu0 0
    %157 = vmatpush2.bf16.msra.mxu0 0
    %158 = vmatprep.subr.bf16.mxu0 0
    %159 = vmatpush2.bf16.msra.mxu0 0
    %160 = vmatprep.subr.bf16.mxu0 0
    %161 = vmatpush2.bf16.msra.mxu0 0
    %162 = vmatprep.subr.bf16.mxu0 0
    %163 = vmatpush2.bf16.msra.mxu0 0
    %164 = vmatprep.subr.bf16.mxu0 0
    %165 = vmatpush2.bf16.msra.mxu0 0
    %166 = vmatprep.subr.bf16.mxu0 0
    %167 = vmatpush2.bf16.msra.mxu0 0
    %168 = vmatprep.subr.bf16.mxu0 0
    %169 = vmatpush2.bf16.msra.mxu0 0
    %170 = vmatprep.mubr.bf16.mxu0 0
    %171 = vmatmul.mubr.bf16.gmra.mxu0 %v29
    %v172 = vpop.f32.mrf.mxu0
    %v173 = vadd.f32 %v51, %v172
    %v174 = vpop.f32.mrf.mxu0
    %v175 = vadd.f32 %v55, %v174
    %v176 = vpop.f32.mrf.mxu0
    %v177 = vpop.f32.mrf.mxu0
    %178 = vdwg.mxu0
    %v179 = vmax.f32 %v173, 0.0
    %v180 = vmax.f32 %v175, 0.0
    %181 = vst [vmem:[%s3] sm:$0xff] %v179
    %182 = vst [vmem:[%s3 + $0x8] sm:$0xff] %v180
    // Predicated region
    $region18: #{bow_proj_device.1} parent=1 // pred_check
      _
    $region19: #{bow_proj_device.1} parent=1 // pred_check_branch
      %184 = sbr.rel (0) target = $region21
    $region20: #{bow_proj_device.1} parent=1 // pred_region
      _
    $region21: #{bow_proj_device.1} parent=1 // pred_fallthru
      _
    // Predicated region
    $region22: #{bow_proj_device.1} parent=1 // pred_check
      _
    $region23: #{bow_proj_device.1} parent=1 // pred_check_branch
      %186 = sbr.rel (0) target = $region25
    $region24: #{bow_proj_device.1} parent=1 // pred_region
      _
    $region25: #{bow_proj_device.1} parent=1 // pred_fallthru
      _
    %187 = vsyncpa [#allocation3], 1

</llo_original>
